<compile_context>
chip_gen: v7x
topology: tpu7x:2x2x1
jax: 0.10.0
libtpu: 0.0.40
codegen_flags: <defaults>
</compile_context>

<pallas_src>
import functools

import jax
import jax.numpy as jnp
from jax import lax
from jax.experimental import pallas as pl
from jax.experimental.pallas import tpu as pltpu

N_STEPS = 8          # fixed Euler steps
HIDDEN = 128         # ODE state width (lane-aligned)
BATCH = 8            # demo batch (sublane-aligned)
BLOCK_M = 512        # batch-tile cap; VMEM is never the binding constraint here


def _round_up(x, m):
    return ((x + m - 1) // m) * m


def _default_bf16_act():
    """bf16 tanh on chips with a bf16 EUP/VPU (v6e/v7x); f32 elsewhere (v5x)."""
    try:
        kind = jax.devices()[0].device_kind.lower()
    except Exception:
        return False
    return not any(tag in kind for tag in ("v2", "v3", "v4", "v5"))


def _choose_tiling(batch, block_m):
    """Return (tm, b_pad).

    Prefers a tile that divides round_up(batch, 8) exactly (no jnp.pad
    round-trip beyond sublane alignment) and yields >= 2 tiles when batch > 8
    so both TensorCores get work on v7x. Falls back to a padded, larger tile
    when the only exact divisors are tiny.
    """
    b_al = _round_up(batch, 8)
    if b_al <= 8:
        return b_al, b_al
    # Target tile: half the batch (2 tiles), capped at block_m.
    target = min(block_m, _round_up(pl.cdiv(b_al, 2), 8))
    m = b_al // 8
    best = None
    for d in range(1, m + 1):
        tm = 8 * d
        if tm > target:
            break
        if m % d == 0:
            best = tm
    if best is not None and best * 4 >= target:
        return best, b_al                      # exact divisor, no extra padding
    return target, _round_up(b_al, target)     # small pad, much bigger tiles


def _node_block_kernel(x_ref, w1_ref, b1_ref, w2_ref, b2_ref, o_ref, *,
                       n_steps, bf16_act):
    """One batch tile of the Neural-ODE block (dt already folded into w2/b2)."""
    h0 = x_ref[...].astype(jnp.float32)
    w1 = w1_ref[...]                     # bf16 (H, H) MXU operand
    w2 = w2_ref[...]                     # bf16 (H, H) MXU operand, pre-scaled by dt
    b1 = b1_ref[...]                     # (1, H) f32 — broadcast per step (cheap)
    b2 = b2_ref[...]                     # (1, H) f32, pre-scaled by dt

    def euler_step(_, h):
        s = jnp.dot(h.astype(jnp.bfloat16), w1,
                    preferred_element_type=jnp.float32) + b1
        if bf16_act:
            z = jnp.tanh(s.astype(jnp.bfloat16))        # bf16 EUP (v6e/v7x)
        else:
            z = jnp.tanh(s).astype(jnp.bfloat16)        # f32 EUP (v5x)
        f = jnp.dot(z, w2, preferred_element_type=jnp.float32) + b2
        return h + f                                     # dt folded into w2/b2

    h = lax.fori_loop(0, n_steps, euler_step, h0, unroll=True)
    o_ref[...] = h.astype(o_ref.dtype)


def node_feature_extractor(x, w1, b1, w2, b2, *, n_steps=N_STEPS,
                           block_m=BLOCK_M, bf16_act=None):
    """x: (B, H) f32; w1,w2: (H, H); b1,b2: (1, H). Returns (B, H) f32."""
    if bf16_act is None:
        bf16_act = _default_bf16_act()
    B, H = x.shape
    tm, b_pad = _choose_tiling(B, block_m)
    x_p = x if b_pad == B else jnp.pad(x, ((0, b_pad - B), (0, 0)))

    dt = jnp.float32(1.0 / n_steps)
    # Weights to bf16 once (halves weight DMA; MXU-native dtype). Fold dt into
    # the second layer so the per-step scale disappears from the kernel.
    w1b = w1.astype(jnp.bfloat16)
    w2b = (w2.astype(jnp.float32) * dt).astype(jnp.bfloat16)
    b1f = b1.astype(jnp.float32)
    b2f = b2.astype(jnp.float32) * dt

    kernel = functools.partial(_node_block_kernel, n_steps=n_steps,
                               bf16_act=bf16_act)
    out = pl.pallas_call(
        kernel,
        out_shape=jax.ShapeDtypeStruct((b_pad, H), x.dtype),
        grid=(b_pad // tm,),
        in_specs=[
            pl.BlockSpec((tm, H), lambda i: (i, 0)),   # x: tiled over batch
            pl.BlockSpec((H, H), lambda i: (0, 0)),    # w1: VMEM-resident
            pl.BlockSpec((1, H), lambda i: (0, 0)),    # b1: VMEM-resident
            pl.BlockSpec((H, H), lambda i: (0, 0)),    # w2: VMEM-resident
            pl.BlockSpec((1, H), lambda i: (0, 0)),    # b2: VMEM-resident
        ],
        out_specs=pl.BlockSpec((tm, H), lambda i: (i, 0)),
        compiler_params=pltpu.CompilerParams(
            dimension_semantics=("parallel",)),        # batch grid shards across TCs
    )(x_p, w1b, b1f, w2b, b2f)

    return out if b_pad == B else out[:B]


def _reference_matched(x, w1, b1, w2, b2, n_steps, bf16_act):
    """Mirrors the kernel's numerics (bf16 MXU operands, dt folded into layer 2)."""
    dt = jnp.float32(1.0 / n_steps)
    w1b = w1.astype(jnp.bfloat16)
    w2b = (w2.astype(jnp.float32) * dt).astype(jnp.bfloat16)
    b1f = b1.astype(jnp.float32)
    b2f = b2.astype(jnp.float32) * dt
    h = x.astype(jnp.float32)
    for _ in range(n_steps):
        s = jnp.dot(h.astype(jnp.bfloat16), w1b,
                    preferred_element_type=jnp.float32) + b1f
        if bf16_act:
            z = jnp.tanh(s.astype(jnp.bfloat16))
        else:
            z = jnp.tanh(s).astype(jnp.bfloat16)
        h = h + jnp.dot(z, w2b, preferred_element_type=jnp.float32) + b2f
    return h


def _reference_f32(x, w1, b1, w2, b2, n_steps=N_STEPS):
    h = x.astype(jnp.float32)
    dt = 1.0 / n_steps
    for _ in range(n_steps):
        z = jnp.tanh(h @ w1 + b1)
        f = z @ w2 + b2
        h = h + dt * f
    return h


if __name__ == "__main__":
    key = jax.random.PRNGKey(0)
    kx, k1, k2, k3, k4 = jax.random.split(key, 5)

    x = jax.random.normal(kx, (BATCH, HIDDEN), dtype=jnp.float32)
    # Deterministic "Kaiming-ish" init for the two linear layers of the ODE fn.
    scale = 1.0 / jnp.sqrt(jnp.float32(HIDDEN))
    w1 = jax.random.normal(k1, (HIDDEN, HIDDEN), dtype=jnp.float32) * scale
    b1 = jax.random.normal(k2, (1, HIDDEN), dtype=jnp.float32) * 0.01
    w2 = jax.random.normal(k3, (HIDDEN, HIDDEN), dtype=jnp.float32) * scale
    b2 = jax.random.normal(k4, (1, HIDDEN), dtype=jnp.float32) * 0.01

    bf16_act = _default_bf16_act()
    out = node_feature_extractor(x, w1, b1, w2, b2, bf16_act=bf16_act)
    out = jax.block_until_ready(out)
    assert out.shape == (BATCH, HIDDEN)

    # Check against a reference with matching numerics (moderate tol: Mosaic vs
    # XLA tanh approximations may differ by ~1 bf16 ulp per step) and against
    # the pure-f32 reference (loose tol: bf16 operands over 8 chained Euler
    # steps accumulate a few percent relative error).
    ref_match = _reference_matched(x, w1, b1, w2, b2, N_STEPS, bf16_act)
    ref_f32 = _reference_f32(x, w1, b1, w2, b2)
    assert jnp.allclose(out, ref_match, atol=2e-2, rtol=2e-2), \
        "mismatch vs matched-numerics reference"
    assert jnp.allclose(out, ref_f32, atol=1e-1, rtol=1e-1), \
        "mismatch vs f32 reference"

    print("KERNEL_OK")
</pallas_src>

<mosaic_0001>
module attributes {stable_mosaic.version = 11 : i64} {
  func.func @_node_block_kernel(%arg0: i32, %arg1: memref<8x128xf32, #tpu.memory_space<vmem>>, %arg2: memref<128x128xbf16, #tpu.memory_space<vmem>>, %arg3: memref<1x128xf32, #tpu.memory_space<vmem>>, %arg4: memref<128x128xbf16, #tpu.memory_space<vmem>>, %arg5: memref<1x128xf32, #tpu.memory_space<vmem>>, %arg6: memref<8x128xf32, #tpu.memory_space<vmem>>) attributes {dimension_semantics = [#tpu.dimension_semantics<parallel>], iteration_bounds = array<i64: 1>, scalar_prefetch = 0 : i64, scratch_operands = 0 : i64, tpu.core_type = #tpu.core_type<tc>, window_params = [{transform_indices = @transform_0, window_bounds = array<i64: 8, 128>}, {pipeline_mode = #tpu.pipeline_mode<synchronous>, transform_indices = @transform_1, window_bounds = array<i64: 128, 128>}, {pipeline_mode = #tpu.pipeline_mode<synchronous>, transform_indices = @transform_2, window_bounds = array<i64: 1, 128>}, {pipeline_mode = #tpu.pipeline_mode<synchronous>, transform_indices = @transform_3, window_bounds = array<i64: 128, 128>}, {pipeline_mode = #tpu.pipeline_mode<synchronous>, transform_indices = @transform_4, window_bounds = array<i64: 1, 128>}, {transform_indices = @transform_5, window_bounds = array<i64: 8, 128>}]} {
    %c0 = arith.constant 0 : index
    %c0_0 = arith.constant 0 : index
    %0 = vector.load %arg1[%c0, %c0_0] : memref<8x128xf32, #tpu.memory_space<vmem>>, vector<8x128xf32>
    %c0_1 = arith.constant 0 : index
    %c0_2 = arith.constant 0 : index
    %1 = vector.load %arg2[%c0_1, %c0_2] : memref<128x128xbf16, #tpu.memory_space<vmem>>, vector<128x128xbf16>
    %c0_3 = arith.constant 0 : index
    %c0_4 = arith.constant 0 : index
    %2 = vector.load %arg4[%c0_3, %c0_4] : memref<128x128xbf16, #tpu.memory_space<vmem>>, vector<128x128xbf16>
    %c0_5 = arith.constant 0 : index
    %c0_6 = arith.constant 0 : index
    %3 = vector.load %arg3[%c0_5, %c0_6] : memref<1x128xf32, #tpu.memory_space<vmem>>, vector<1x128xf32>
    %c0_7 = arith.constant 0 : index
    %c0_8 = arith.constant 0 : index
    %4 = vector.load %arg5[%c0_7, %c0_8] : memref<1x128xf32, #tpu.memory_space<vmem>>, vector<1x128xf32>
    %c0_i32 = arith.constant 0 : i32
    %5 = arith.truncf %0 : vector<8x128xf32> to vector<8x128xbf16>
    %cst = arith.constant dense<0.000000e+00> : vector<8x128xf32>
    %6 = tpu.matmul %5, %1, %cst {dimension_numbers = #tpu.dot_dimension_numbers<[1], [0], [0], [1], [0, 0, 1, 1], [], []>} : vector<8x128xbf16>, vector<128x128xbf16>, vector<8x128xf32> -> vector<8x128xf32>
    %7 = vector.broadcast %3 : vector<1x128xf32> to vector<8x128xf32>
    %8 = arith.addf %6, %7 : vector<8x128xf32>
    %9 = arith.truncf %8 : vector<8x128xf32> to vector<8x128xbf16>
    %10 = math.tanh %9 : vector<8x128xbf16>
    %cst_9 = arith.constant dense<0.000000e+00> : vector<8x128xf32>
    %11 = tpu.matmul %10, %2, %cst_9 {dimension_numbers = #tpu.dot_dimension_numbers<[1], [0], [0], [1], [0, 0, 1, 1], [], []>} : vector<8x128xbf16>, vector<128x128xbf16>, vector<8x128xf32> -> vector<8x128xf32>
    %12 = vector.broadcast %4 : vector<1x128xf32> to vector<8x128xf32>
    %13 = arith.addf %11, %12 : vector<8x128xf32>
    %14 = arith.addf %0, %13 : vector<8x128xf32>
    %c1_i32 = arith.constant 1 : i32
    %15 = arith.truncf %14 : vector<8x128xf32> to vector<8x128xbf16>
    %cst_10 = arith.constant dense<0.000000e+00> : vector<8x128xf32>
    %16 = tpu.matmul %15, %1, %cst_10 {dimension_numbers = #tpu.dot_dimension_numbers<[1], [0], [0], [1], [0, 0, 1, 1], [], []>} : vector<8x128xbf16>, vector<128x128xbf16>, vector<8x128xf32> -> vector<8x128xf32>
    %17 = vector.broadcast %3 : vector<1x128xf32> to vector<8x128xf32>
    %18 = arith.addf %16, %17 : vector<8x128xf32>
    %19 = arith.truncf %18 : vector<8x128xf32> to vector<8x128xbf16>
    %20 = math.tanh %19 : vector<8x128xbf16>
    %cst_11 = arith.constant dense<0.000000e+00> : vector<8x128xf32>
    %21 = tpu.matmul %20, %2, %cst_11 {dimension_numbers = #tpu.dot_dimension_numbers<[1], [0], [0], [1], [0, 0, 1, 1], [], []>} : vector<8x128xbf16>, vector<128x128xbf16>, vector<8x128xf32> -> vector<8x128xf32>
    %22 = vector.broadcast %4 : vector<1x128xf32> to vector<8x128xf32>
    %23 = arith.addf %21, %22 : vector<8x128xf32>
    %24 = arith.addf %14, %23 : vector<8x128xf32>
    %c2_i32 = arith.constant 2 : i32
    %25 = arith.truncf %24 : vector<8x128xf32> to vector<8x128xbf16>
    %cst_12 = arith.constant dense<0.000000e+00> : vector<8x128xf32>
    %26 = tpu.matmul %25, %1, %cst_12 {dimension_numbers = #tpu.dot_dimension_numbers<[1], [0], [0], [1], [0, 0, 1, 1], [], []>} : vector<8x128xbf16>, vector<128x128xbf16>, vector<8x128xf32> -> vector<8x128xf32>
    %27 = vector.broadcast %3 : vector<1x128xf32> to vector<8x128xf32>
    %28 = arith.addf %26, %27 : vector<8x128xf32>
    %29 = arith.truncf %28 : vector<8x128xf32> to vector<8x128xbf16>
    %30 = math.tanh %29 : vector<8x128xbf16>
    %cst_13 = arith.constant dense<0.000000e+00> : vector<8x128xf32>
    %31 = tpu.matmul %30, %2, %cst_13 {dimension_numbers = #tpu.dot_dimension_numbers<[1], [0], [0], [1], [0, 0, 1, 1], [], []>} : vector<8x128xbf16>, vector<128x128xbf16>, vector<8x128xf32> -> vector<8x128xf32>
    %32 = vector.broadcast %4 : vector<1x128xf32> to vector<8x128xf32>
    %33 = arith.addf %31, %32 : vector<8x128xf32>
    %34 = arith.addf %24, %33 : vector<8x128xf32>
    %c3_i32 = arith.constant 3 : i32
    %35 = arith.truncf %34 : vector<8x128xf32> to vector<8x128xbf16>
    %cst_14 = arith.constant dense<0.000000e+00> : vector<8x128xf32>
    %36 = tpu.matmul %35, %1, %cst_14 {dimension_numbers = #tpu.dot_dimension_numbers<[1], [0], [0], [1], [0, 0, 1, 1], [], []>} : vector<8x128xbf16>, vector<128x128xbf16>, vector<8x128xf32> -> vector<8x128xf32>
    %37 = vector.broadcast %3 : vector<1x128xf32> to vector<8x128xf32>
    %38 = arith.addf %36, %37 : vector<8x128xf32>
    %39 = arith.truncf %38 : vector<8x128xf32> to vector<8x128xbf16>
    %40 = math.tanh %39 : vector<8x128xbf16>
    %cst_15 = arith.constant dense<0.000000e+00> : vector<8x128xf32>
    %41 = tpu.matmul %40, %2, %cst_15 {dimension_numbers = #tpu.dot_dimension_numbers<[1], [0], [0], [1], [0, 0, 1, 1], [], []>} : vector<8x128xbf16>, vector<128x128xbf16>, vector<8x128xf32> -> vector<8x128xf32>
    %42 = vector.broadcast %4 : vector<1x128xf32> to vector<8x128xf32>
    %43 = arith.addf %41, %42 : vector<8x128xf32>
    %44 = arith.addf %34, %43 : vector<8x128xf32>
    %c4_i32 = arith.constant 4 : i32
    %45 = arith.truncf %44 : vector<8x128xf32> to vector<8x128xbf16>
    %cst_16 = arith.constant dense<0.000000e+00> : vector<8x128xf32>
    %46 = tpu.matmul %45, %1, %cst_16 {dimension_numbers = #tpu.dot_dimension_numbers<[1], [0], [0], [1], [0, 0, 1, 1], [], []>} : vector<8x128xbf16>, vector<128x128xbf16>, vector<8x128xf32> -> vector<8x128xf32>
    %47 = vector.broadcast %3 : vector<1x128xf32> to vector<8x128xf32>
    %48 = arith.addf %46, %47 : vector<8x128xf32>
    %49 = arith.truncf %48 : vector<8x128xf32> to vector<8x128xbf16>
    %50 = math.tanh %49 : vector<8x128xbf16>
    %cst_17 = arith.constant dense<0.000000e+00> : vector<8x128xf32>
    %51 = tpu.matmul %50, %2, %cst_17 {dimension_numbers = #tpu.dot_dimension_numbers<[1], [0], [0], [1], [0, 0, 1, 1], [], []>} : vector<8x128xbf16>, vector<128x128xbf16>, vector<8x128xf32> -> vector<8x128xf32>
    %52 = vector.broadcast %4 : vector<1x128xf32> to vector<8x128xf32>
    %53 = arith.addf %51, %52 : vector<8x128xf32>
    %54 = arith.addf %44, %53 : vector<8x128xf32>
    %c5_i32 = arith.constant 5 : i32
    %55 = arith.truncf %54 : vector<8x128xf32> to vector<8x128xbf16>
    %cst_18 = arith.constant dense<0.000000e+00> : vector<8x128xf32>
    %56 = tpu.matmul %55, %1, %cst_18 {dimension_numbers = #tpu.dot_dimension_numbers<[1], [0], [0], [1], [0, 0, 1, 1], [], []>} : vector<8x128xbf16>, vector<128x128xbf16>, vector<8x128xf32> -> vector<8x128xf32>
    %57 = vector.broadcast %3 : vector<1x128xf32> to vector<8x128xf32>
    %58 = arith.addf %56, %57 : vector<8x128xf32>
    %59 = arith.truncf %58 : vector<8x128xf32> to vector<8x128xbf16>
    %60 = math.tanh %59 : vector<8x128xbf16>
    %cst_19 = arith.constant dense<0.000000e+00> : vector<8x128xf32>
    %61 = tpu.matmul %60, %2, %cst_19 {dimension_numbers = #tpu.dot_dimension_numbers<[1], [0], [0], [1], [0, 0, 1, 1], [], []>} : vector<8x128xbf16>, vector<128x128xbf16>, vector<8x128xf32> -> vector<8x128xf32>
    %62 = vector.broadcast %4 : vector<1x128xf32> to vector<8x128xf32>
    %63 = arith.addf %61, %62 : vector<8x128xf32>
    %64 = arith.addf %54, %63 : vector<8x128xf32>
    %c6_i32 = arith.constant 6 : i32
    %65 = arith.truncf %64 : vector<8x128xf32> to vector<8x128xbf16>
    %cst_20 = arith.constant dense<0.000000e+00> : vector<8x128xf32>
    %66 = tpu.matmul %65, %1, %cst_20 {dimension_numbers = #tpu.dot_dimension_numbers<[1], [0], [0], [1], [0, 0, 1, 1], [], []>} : vector<8x128xbf16>, vector<128x128xbf16>, vector<8x128xf32> -> vector<8x128xf32>
    %67 = vector.broadcast %3 : vector<1x128xf32> to vector<8x128xf32>
    %68 = arith.addf %66, %67 : vector<8x128xf32>
    %69 = arith.truncf %68 : vector<8x128xf32> to vector<8x128xbf16>
    %70 = math.tanh %69 : vector<8x128xbf16>
    %cst_21 = arith.constant dense<0.000000e+00> : vector<8x128xf32>
    %71 = tpu.matmul %70, %2, %cst_21 {dimension_numbers = #tpu.dot_dimension_numbers<[1], [0], [0], [1], [0, 0, 1, 1], [], []>} : vector<8x128xbf16>, vector<128x128xbf16>, vector<8x128xf32> -> vector<8x128xf32>
    %72 = vector.broadcast %4 : vector<1x128xf32> to vector<8x128xf32>
    %73 = arith.addf %71, %72 : vector<8x128xf32>
    %74 = arith.addf %64, %73 : vector<8x128xf32>
    %c7_i32 = arith.constant 7 : i32
    %75 = arith.truncf %74 : vector<8x128xf32> to vector<8x128xbf16>
    %cst_22 = arith.constant dense<0.000000e+00> : vector<8x128xf32>
    %76 = tpu.matmul %75, %1, %cst_22 {dimension_numbers = #tpu.dot_dimension_numbers<[1], [0], [0], [1], [0, 0, 1, 1], [], []>} : vector<8x128xbf16>, vector<128x128xbf16>, vector<8x128xf32> -> vector<8x128xf32>
    %77 = vector.broadcast %3 : vector<1x128xf32> to vector<8x128xf32>
    %78 = arith.addf %76, %77 : vector<8x128xf32>
    %79 = arith.truncf %78 : vector<8x128xf32> to vector<8x128xbf16>
    %80 = math.tanh %79 : vector<8x128xbf16>
    %cst_23 = arith.constant dense<0.000000e+00> : vector<8x128xf32>
    %81 = tpu.matmul %80, %2, %cst_23 {dimension_numbers = #tpu.dot_dimension_numbers<[1], [0], [0], [1], [0, 0, 1, 1], [], []>} : vector<8x128xbf16>, vector<128x128xbf16>, vector<8x128xf32> -> vector<8x128xf32>
    %82 = vector.broadcast %4 : vector<1x128xf32> to vector<8x128xf32>
    %83 = arith.addf %81, %82 : vector<8x128xf32>
    %84 = arith.addf %74, %83 : vector<8x128xf32>
    %c0_24 = arith.constant 0 : index
    %c0_25 = arith.constant 0 : index
    %85 = vector.load %arg6[%c0_24, %c0_25] : memref<8x128xf32, #tpu.memory_space<vmem>>, vector<8x128xf32>
    tpu.vector_store %arg6[%c0_24, %c0_25], %84 {strides = array<i32>} : memref<8x128xf32, #tpu.memory_space<vmem>>, vector<8x128xf32>,
    return
  }
  func.func @transform_0(%arg0: i32) -> (i32, i32) {
    %c0_i32 = arith.constant 0 : i32
    %c0_i32_0 = arith.constant 0 : i32
    return %arg0, %c0_i32 : i32, i32
  }
  func.func @transform_1(%arg0: i32) -> (i32, i32) {
    %c0_i32 = arith.constant 0 : i32
    %c0_i32_0 = arith.constant 0 : i32
    %c0_i32_1 = arith.constant 0 : i32
    return %c0_i32, %c0_i32_0 : i32, i32
  }
  func.func @transform_2(%arg0: i32) -> (i32, i32) {
    %c0_i32 = arith.constant 0 : i32
    %c0_i32_0 = arith.constant 0 : i32
    %c0_i32_1 = arith.constant 0 : i32
    return %c0_i32, %c0_i32_0 : i32, i32
  }
  func.func @transform_3(%arg0: i32) -> (i32, i32) {
    %c0_i32 = arith.constant 0 : i32
    %c0_i32_0 = arith.constant 0 : i32
    %c0_i32_1 = arith.constant 0 : i32
    return %c0_i32, %c0_i32_0 : i32, i32
  }
  func.func @transform_4(%arg0: i32) -> (i32, i32) {
    %c0_i32 = arith.constant 0 : i32
    %c0_i32_0 = arith.constant 0 : i32
    %c0_i32_1 = arith.constant 0 : i32
    return %c0_i32, %c0_i32_0 : i32, i32
  }
  func.func @transform_5(%arg0: i32) -> (i32, i32) {
    %c0_i32 = arith.constant 0 : i32
    %c0_i32_0 = arith.constant 0 : i32
    return %arg0, %c0_i32 : i32, i32
  }
}

</mosaic_0001>

<llo_original>
// kernel: tpu_custom_call.1
$region0: #{tpu_custom_call.1}
  #allocation0 [shape = 'u32[]', space=smem, size = 0x4, offset = 0x4, fixed_abs, tag = 'smem constant byte address 0x4 - core index']
  #allocation1 [shape = 'u32[144,128]{1,0:T(1,128)}', space=vmem, size = 0x12000, scoped, tag = 'internal scratch']
  %s0 = inlined_call_operand.hbm [shape: f32[8,128], index: 0, kind: input, shape index: {}]
  %s1 = inlined_call_operand.hbm [shape: bf16[128,128], index: 1, kind: input, shape index: {}]
  %s2 = inlined_call_operand.vmem [shape: f32[1,128], index: 2, kind: input, shape index: {}]
  %s3 = inlined_call_operand.hbm [shape: bf16[128,128], index: 3, kind: input, shape index: {}]
  %s4 = inlined_call_operand.vmem [shape: f32[1,128], index: 4, kind: input, shape index: {}]
  %s5 = inlined_call_operand.hbm [shape: f32[8,128], index: 5, kind: output, shape index: {}]
  %s6 = sld [smem:[#allocation0]]
  $region42: #{tpu_custom_call.1} parent=0
    _
  %s8 = ssub.s32 1, %s6
  %s9 = scalar_select 0, %s8, %s6
  $region1: #{tpu_custom_call.1} parent=0
    #allocation2 [shape = 'u8[4096]{0}', space=vmem, size = 0x1000, scoped, tag = 'input window, operand 0, single buffered']
    #allocation3 [shape = 's32[1]{0}', space=sflag, size = 0x4, scoped, tag = 'scoped memory for tpu_custom_call.1']
    #allocation4 [shape = 's32[1]{0}', space=sflag, size = 0x4, scoped, tag = 'scoped memory for tpu_custom_call.1']
    #allocation5 [shape = 'u8[32768]{0}', space=vmem, size = 0x8000, scoped, tag = 'input window, operand 1, single buffered']
    #allocation6 [shape = 's32[1]{0}', space=sflag, size = 0x4, scoped, tag = 'scoped memory for tpu_custom_call.1']
    #allocation7 [shape = 'u8[32768]{0}', space=vmem, size = 0x8000, scoped, tag = 'input window, operand 3, single buffered']
    #allocation8 [shape = 'u8[4096]{0}', space=vmem, size = 0x1000, scoped, tag = 'output window, operand 0, single buffered']
    %10 = vsyncpa [#allocation3], 0
    %11 = vsyncpa [#allocation6], 0
    %12 = vsyncpa [#allocation4], 0
    // Predicated region
    $region2: #{tpu_custom_call.1} parent=1 // pred_check
      _
    $region3: #{tpu_custom_call.1} parent=1 // pred_check_branch
      %14 = sbr.rel (0) target = $region5
    $region4: #{tpu_custom_call.1} parent=1 // pred_region
      %s16 = ssub.s32 128, 128
      %17 = vsyncadd [#allocation3], %s16
      %s19 = sshll.u32 [#allocation2], 4
      %s20 = int_to_ptr.vmem [resolvable:$true] %s19
      %22 = dma.hbm_to_vmem [thread:$0]  %s0, 128, %s20, [#allocation3]
    $region5: #{tpu_custom_call.1} parent=1 // pred_fallthru
      _
    // Predicated region
    $region6: #{tpu_custom_call.1} parent=1 // pred_check
      _
    $region7: #{tpu_custom_call.1} parent=1 // pred_check_branch
      %24 = sbr.rel (0) target = $region9
    $region8: #{tpu_custom_call.1} parent=1 // pred_region
      %s26 = ssub.s32 1024, 1024
      %27 = vsyncadd [#allocation6], %s26
      %s28 = sshll.u32 [#allocation5], 4
      %s29 = int_to_ptr.vmem [resolvable:$true] %s28
      %34 = dma.hbm_to_vmem [thread:$0]  %s1, 1024, %s29, [#allocation6], 64, 64, 4
    $region9: #{tpu_custom_call.1} parent=1 // pred_fallthru
      _
    // Predicated region
    $region10: #{tpu_custom_call.1} parent=1 // pred_check
      _
    $region11: #{tpu_custom_call.1} parent=1 // pred_check_branch
      %36 = sbr.rel (0) target = $region13
    $region12: #{tpu_custom_call.1} parent=1 // pred_region
      _
    $region13: #{tpu_custom_call.1} parent=1 // pred_fallthru
      _
    // Predicated region
    $region14: #{tpu_custom_call.1} parent=1 // pred_check
      _
    $region15: #{tpu_custom_call.1} parent=1 // pred_check_branch
      %38 = sbr.rel (0) target = $region17
    $region16: #{tpu_custom_call.1} parent=1 // pred_region
      %s40 = ssub.s32 1024, 1024
      %41 = vsyncadd [#allocation6], %s40
      %s42 = sshll.u32 [#allocation7], 4
      %s43 = int_to_ptr.vmem [resolvable:$true] %s42
      %48 = dma.hbm_to_vmem [thread:$0]  %s3, 1024, %s43, [#allocation6], 64, 64, 4
    $region17: #{tpu_custom_call.1} parent=1 // pred_fallthru
      _
    // Predicated region
    $region18: #{tpu_custom_call.1} parent=1 // pred_check
      _
    $region19: #{tpu_custom_call.1} parent=1 // pred_check_branch
      %50 = sbr.rel (0) target = $region21
    $region20: #{tpu_custom_call.1} parent=1 // pred_region
      _
    $region21: #{tpu_custom_call.1} parent=1 // pred_fallthru
      _
    // Predicated region
    $region22: #{tpu_custom_call.1} parent=1 // pred_check
      _
    $region23: #{tpu_custom_call.1} parent=1 // pred_check_branch
      %52 = sbr.rel (0) target = $region25
    $region24: #{tpu_custom_call.1} parent=1 // pred_region
      %53 = dma.done [#allocation3], 128
    $region25: #{tpu_custom_call.1} parent=1 // pred_fallthru
      _
    // Predicated region
    $region26: #{tpu_custom_call.1} parent=1 // pred_check
      _
    $region27: #{tpu_custom_call.1} parent=1 // pred_check_branch
      %55 = sbr.rel (0) target = $region29
    $region28: #{tpu_custom_call.1} parent=1 // pred_region
      %56 = dma.done [#allocation6], 1024
    $region29: #{tpu_custom_call.1} parent=1 // pred_fallthru
      _
    // Predicated region
    $region30: #{tpu_custom_call.1} parent=1 // pred_check
      _
    $region31: #{tpu_custom_call.1} parent=1 // pred_check_branch
      %58 = sbr.rel (0) target = $region33
    $region32: #{tpu_custom_call.1} parent=1 // pred_region
      %59 = dma.done [#allocation6], 1024
    $region33: #{tpu_custom_call.1} parent=1 // pred_fallthru
      _
    %v61 = vld [vmem:[#allocation2] sm:$0xff]
    %v62 = vld [vmem:[#allocation5] sm:$0xf]
    %v63 = vld [vmem:[#allocation5 + $0x4] sm:$0xf]
    %v64 = vld [vmem:[#allocation5 + $0x8] sm:$0xf]
    %v65 = vld [vmem:[#allocation5 + $0xc] sm:$0xf]
    %v66 = vld [vmem:[#allocation5 + $0x10] sm:$0xf]
    %v67 = vld [vmem:[#allocation5 + $0x14] sm:$0xf]
    %v68 = vld [vmem:[#allocation5 + $0x18] sm:$0xf]
    %v69 = vld [vmem:[#allocation5 + $0x1c] sm:$0xf]
    %v70 = vld [vmem:[#allocation5 + $0x20] sm:$0xf]
    %v71 = vld [vmem:[#allocation5 + $0x24] sm:$0xf]
    %v72 = vld [vmem:[#allocation5 + $0x28] sm:$0xf]
    %v73 = vld [vmem:[#allocation5 + $0x2c] sm:$0xf]
    %v74 = vld [vmem:[#allocation5 + $0x30] sm:$0xf]
    %v75 = vld [vmem:[#allocation5 + $0x34] sm:$0xf]
    %v76 = vld [vmem:[#allocation5 + $0x38] sm:$0xf]
    %v77 = vld [vmem:[#allocation5 + $0x3c] sm:$0xf]
    %v78 = vld [vmem:[#allocation7] sm:$0xf]
    %v79 = vld [vmem:[#allocation7 + $0x4] sm:$0xf]
    %v80 = vld [vmem:[#allocation7 + $0x8] sm:$0xf]
    %v81 = vld [vmem:[#allocation7 + $0xc] sm:$0xf]
    %v82 = vld [vmem:[#allocation7 + $0x10] sm:$0xf]
    %v83 = vld [vmem:[#allocation7 + $0x14] sm:$0xf]
    %v84 = vld [vmem:[#allocation7 + $0x18] sm:$0xf]
    %v85 = vld [vmem:[#allocation7 + $0x1c] sm:$0xf]
    %v86 = vld [vmem:[#allocation7 + $0x20] sm:$0xf]
    %v87 = vld [vmem:[#allocation7 + $0x24] sm:$0xf]
    %v88 = vld [vmem:[#allocation7 + $0x28] sm:$0xf]
    %v89 = vld [vmem:[#allocation7 + $0x2c] sm:$0xf]
    %v90 = vld [vmem:[#allocation7 + $0x30] sm:$0xf]
    %v91 = vld [vmem:[#allocation7 + $0x34] sm:$0xf]
    %v92 = vld [vmem:[#allocation7 + $0x38] sm:$0xf]
    %v93 = vld [vmem:[#allocation7 + $0x3c] sm:$0xf]
    %v94 = vld [vmem:[%s2] sm:$0x1]
    %v95 = vld [vmem:[%s4] sm:$0x1]
    %v96 = vpack.c.bf16 %v61, %v61
    %v98 = vlaneseq
    %v99 = vshrl.u32 %v98, 7
    %v100 = vsub.s32 0, %v99
    %v101 = vrot.slane %v94, %v100
    %v119 = vunpack.c.l.b16 %v62
    %v120 = vunpack.c.l.b16 %v63
    %v121 = vunpack.c.l.b16 %v64
    %v122 = vunpack.c.l.b16 %v65
    %v123 = vunpack.c.l.b16 %v66
    %v124 = vunpack.c.l.b16 %v67
    %v125 = vunpack.c.l.b16 %v68
    %v126 = vunpack.c.l.b16 %v69
    %v127 = vunpack.c.l.b16 %v70
    %v128 = vunpack.c.l.b16 %v71
    %v129 = vunpack.c.l.b16 %v72
    %v130 = vunpack.c.l.b16 %v73
    %v131 = vunpack.c.l.b16 %v74
    %v132 = vunpack.c.l.b16 %v75
    %v133 = vunpack.c.l.b16 %v76
    %v134 = vunpack.c.l.b16 %v77
    %v135 = vpack.c.b16 %v120, %v119
    %v136 = vpack.c.b16 %v122, %v121
    %v137 = vpack.c.b16 %v124, %v123
    %v138 = vpack.c.b16 %v126, %v125
    %v139 = vpack.c.b16 %v128, %v127
    %v140 = vpack.c.b16 %v130, %v129
    %v141 = vpack.c.b16 %v132, %v131
    %v142 = vpack.c.b16 %v134, %v133
    %151 = vmatprep.subr.bf16.mxu0 0
    %152 = vmatpush1.bf16.msra.mxu0 %v135
    %153 = vmatprep.subr.bf16.mxu0 0
    %154 = vmatpush1.bf16.msra.mxu0 %v136
    %155 = vmatprep.subr.bf16.mxu0 0
    %156 = vmatpush1.bf16.msra.mxu0 %v137
    %157 = vmatprep.subr.bf16.mxu0 0
    %158 = vmatpush1.bf16.msra.mxu0 %v138
    %159 = vmatprep.subr.bf16.mxu0 0
    %160 = vmatpush1.bf16.msra.mxu0 %v139
    %161 = vmatprep.subr.bf16.mxu0 0
    %162 = vmatpush1.bf16.msra.mxu0 %v140
    %163 = vmatprep.subr.bf16.mxu0 0
    %164 = vmatpush1.bf16.msra.mxu0 %v141
    %165 = vmatprep.subr.bf16.mxu0 0
    %166 = vmatpush1.bf16.msra.mxu0 %v142
    %167 = vmatprep.subr.bf16.mxu0 0
    %168 = vmatpush1.bf16.msra.mxu0 0
    %169 = vmatprep.subr.bf16.mxu0 0
    %170 = vmatpush1.bf16.msra.mxu0 0
    %171 = vmatprep.subr.bf16.mxu0 0
    %172 = vmatpush1.bf16.msra.mxu0 0
    %173 = vmatprep.subr.bf16.mxu0 0
    %174 = vmatpush1.bf16.msra.mxu0 0
    %175 = vmatprep.subr.bf16.mxu0 0
    %176 = vmatpush1.bf16.msra.mxu0 0
    %177 = vmatprep.subr.bf16.mxu0 0
    %178 = vmatpush1.bf16.msra.mxu0 0
    %179 = vmatprep.subr.bf16.mxu0 0
    %180 = vmatpush1.bf16.msra.mxu0 0
    %181 = vmatprep.subr.bf16.mxu0 0
    %182 = vmatpush1.bf16.msra.mxu0 0
    %183 = vmatprep.mubr.bf16.mxu0 0
    %184 = vmatmul.mubr.bf16.gmra.mrb[0].mxu0 %v96
    %v185 = vpop.f32.mrb[0].mxu0
    %v186 = vadd.f32 %v101, %v185
    %v187 = vpop.f32.mrb[0].mxu0
    %v188 = vpop.f32.mrb[0].mxu0
    %v189 = vpop.f32.mrb[0].mxu0
    %190 = vdwg.mxu0
    %v191 = vpack.c.bf16 %v186, %v186
    %v192 = vtanh.bf16.pop %v191
    %v194 = vlaneseq
    %v195 = vshrl.u32 %v194, 7
    %v196 = vsub.s32 0, %v195
    %v197 = vrot.slane %v95, %v196
    %v215 = vunpack.c.l.b16 %v78
    %v216 = vunpack.c.l.b16 %v79
    %v217 = vunpack.c.l.b16 %v80
    %v218 = vunpack.c.l.b16 %v81
    %v219 = vunpack.c.l.b16 %v82
    %v220 = vunpack.c.l.b16 %v83
    %v221 = vunpack.c.l.b16 %v84
    %v222 = vunpack.c.l.b16 %v85
    %v223 = vunpack.c.l.b16 %v86
    %v224 = vunpack.c.l.b16 %v87
    %v225 = vunpack.c.l.b16 %v88
    %v226 = vunpack.c.l.b16 %v89
    %v227 = vunpack.c.l.b16 %v90
    %v228 = vunpack.c.l.b16 %v91
    %v229 = vunpack.c.l.b16 %v92
    %v230 = vunpack.c.l.b16 %v93
    %v231 = vpack.c.b16 %v216, %v215
    %v232 = vpack.c.b16 %v218, %v217
    %v233 = vpack.c.b16 %v220, %v219
    %v234 = vpack.c.b16 %v222, %v221
    %v235 = vpack.c.b16 %v224, %v223
    %v236 = vpack.c.b16 %v226, %v225
    %v237 = vpack.c.b16 %v228, %v227
    %v238 = vpack.c.b16 %v230, %v229
    %247 = vmatprep.subr.bf16.mxu0 0
    %248 = vmatpush1.bf16.msra.mxu0 %v231
    %249 = vmatprep.subr.bf16.mxu0 0
    %250 = vmatpush1.bf16.msra.mxu0 %v232
    %251 = vmatprep.subr.bf16.mxu0 0
    %252 = vmatpush1.bf16.msra.mxu0 %v233
    %253 = vmatprep.subr.bf16.mxu0 0
    %254 = vmatpush1.bf16.msra.mxu0 %v234
    %255 = vmatprep.subr.bf16.mxu0 0
    %256 = vmatpush1.bf16.msra.mxu0 %v235
    %257 = vmatprep.subr.bf16.mxu0 0
    %258 = vmatpush1.bf16.msra.mxu0 %v236
    %259 = vmatprep.subr.bf16.mxu0 0
    %260 = vmatpush1.bf16.msra.mxu0 %v237
    %261 = vmatprep.subr.bf16.mxu0 0
    %262 = vmatpush1.bf16.msra.mxu0 %v238
    %263 = vmatprep.subr.bf16.mxu0 0
    %264 = vmatpush1.bf16.msra.mxu0 0
    %265 = vmatprep.subr.bf16.mxu0 0
    %266 = vmatpush1.bf16.msra.mxu0 0
    %267 = vmatprep.subr.bf16.mxu0 0
    %268 = vmatpush1.bf16.msra.mxu0 0
    %269 = vmatprep.subr.bf16.mxu0 0
    %270 = vmatpush1.bf16.msra.mxu0 0
    %271 = vmatprep.subr.bf16.mxu0 0
    %272 = vmatpush1.bf16.msra.mxu0 0
    %273 = vmatprep.subr.bf16.mxu0 0
    %274 = vmatpush1.bf16.msra.mxu0 0
    %275 = vmatprep.subr.bf16.mxu0 0
    %276 = vmatpush1.bf16.msra.mxu0 0
    %277 = vmatprep.subr.bf16.mxu0 0
    %278 = vmatpush1.bf16.msra.mxu0 0
    %279 = vmatprep.mubr.bf16.mxu0 0
    %280 = vmatmul.mubr.bf16.gmra.mrb[0].mxu0 %v192
    %v281 = vpop.f32.mrb[0].mxu0
    %v282 = vadd.f32 %v197, %v281
    %v283 = vpop.f32.mrb[0].mxu0
    %v284 = vpop.f32.mrb[0].mxu0
    %v285 = vpop.f32.mrb[0].mxu0
    %286 = vdwg.mxu0
    %v287 = vadd.f32 %v61, %v282
    %v288 = vpack.c.bf16 %v287, %v287
    %289 = vmatprep.subr.bf16.mxu0 0
    %290 = vmatpush1.bf16.msra.mxu0 %v135
    %291 = vmatprep.subr.bf16.mxu0 0
    %292 = vmatpush1.bf16.msra.mxu0 %v136
    %293 = vmatprep.subr.bf16.mxu0 0
    %294 = vmatpush1.bf16.msra.mxu0 %v137
    %295 = vmatprep.subr.bf16.mxu0 0
    %296 = vmatpush1.bf16.msra.mxu0 %v138
    %297 = vmatprep.subr.bf16.mxu0 0
    %298 = vmatpush1.bf16.msra.mxu0 %v139
    %299 = vmatprep.subr.bf16.mxu0 0
    %300 = vmatpush1.bf16.msra.mxu0 %v140
    %301 = vmatprep.subr.bf16.mxu0 0
    %302 = vmatpush1.bf16.msra.mxu0 %v141
    %303 = vmatprep.subr.bf16.mxu0 0
    %304 = vmatpush1.bf16.msra.mxu0 %v142
    %305 = vmatprep.subr.bf16.mxu0 0
    %306 = vmatpush1.bf16.msra.mxu0 0
    %307 = vmatprep.subr.bf16.mxu0 0
    %308 = vmatpush1.bf16.msra.mxu0 0
    %309 = vmatprep.subr.bf16.mxu0 0
    %310 = vmatpush1.bf16.msra.mxu0 0
    %311 = vmatprep.subr.bf16.mxu0 0
    %312 = vmatpush1.bf16.msra.mxu0 0
    %313 = vmatprep.subr.bf16.mxu0 0
    %314 = vmatpush1.bf16.msra.mxu0 0
    %315 = vmatprep.subr.bf16.mxu0 0
    %316 = vmatpush1.bf16.msra.mxu0 0
    %317 = vmatprep.subr.bf16.mxu0 0
    %318 = vmatpush1.bf16.msra.mxu0 0
    %319 = vmatprep.subr.bf16.mxu0 0
    %320 = vmatpush1.bf16.msra.mxu0 0
    %321 = vmatprep.mubr.bf16.mxu0 0
    %322 = vmatmul.mubr.bf16.gmra.mrb[0].mxu0 %v288
    %v323 = vpop.f32.mrb[0].mxu0
    %v324 = vadd.f32 %v101, %v323
    %v325 = vpop.f32.mrb[0].mxu0
    %v326 = vpop.f32.mrb[0].mxu0
    %v327 = vpop.f32.mrb[0].mxu0
    %328 = vdwg.mxu0
    %v329 = vpack.c.bf16 %v324, %v324
    %v330 = vtanh.bf16.pop %v329
    %331 = vmatprep.subr.bf16.mxu0 0
    %332 = vmatpush1.bf16.msra.mxu0 %v231
    %333 = vmatprep.subr.bf16.mxu0 0
    %334 = vmatpush1.bf16.msra.mxu0 %v232
    %335 = vmatprep.subr.bf16.mxu0 0
    %336 = vmatpush1.bf16.msra.mxu0 %v233
    %337 = vmatprep.subr.bf16.mxu0 0
    %338 = vmatpush1.bf16.msra.mxu0 %v234
    %339 = vmatprep.subr.bf16.mxu0 0
    %340 = vmatpush1.bf16.msra.mxu0 %v235
    %341 = vmatprep.subr.bf16.mxu0 0
    %342 = vmatpush1.bf16.msra.mxu0 %v236
    %343 = vmatprep.subr.bf16.mxu0 0
    %344 = vmatpush1.bf16.msra.mxu0 %v237
    %345 = vmatprep.subr.bf16.mxu0 0
    %346 = vmatpush1.bf16.msra.mxu0 %v238
    %347 = vmatprep.subr.bf16.mxu0 0
    %348 = vmatpush1.bf16.msra.mxu0 0
    %349 = vmatprep.subr.bf16.mxu0 0
    %350 = vmatpush1.bf16.msra.mxu0 0
    %351 = vmatprep.subr.bf16.mxu0 0
    %352 = vmatpush1.bf16.msra.mxu0 0
    %353 = vmatprep.subr.bf16.mxu0 0
    %354 = vmatpush1.bf16.msra.mxu0 0
    %355 = vmatprep.subr.bf16.mxu0 0
    %356 = vmatpush1.bf16.msra.mxu0 0
    %357 = vmatprep.subr.bf16.mxu0 0
    %358 = vmatpush1.bf16.msra.mxu0 0
    %359 = vmatprep.subr.bf16.mxu0 0
    %360 = vmatpush1.bf16.msra.mxu0 0
    %361 = vmatprep.subr.bf16.mxu0 0
    %362 = vmatpush1.bf16.msra.mxu0 0
    %363 = vmatprep.mubr.bf16.mxu0 0
    %364 = vmatmul.mubr.bf16.gmra.mrb[0].mxu0 %v330
    %v365 = vpop.f32.mrb[0].mxu0
    %v366 = vadd.f32 %v197, %v365
    %v367 = vpop.f32.mrb[0].mxu0
    %v368 = vpop.f32.mrb[0].mxu0
    %v369 = vpop.f32.mrb[0].mxu0
    %370 = vdwg.mxu0
    %v371 = vadd.f32 %v287, %v366
    %v372 = vpack.c.bf16 %v371, %v371
    %373 = vmatprep.subr.bf16.mxu0 0
    %374 = vmatpush1.bf16.msra.mxu0 %v135
    %375 = vmatprep.subr.bf16.mxu0 0
    %376 = vmatpush1.bf16.msra.mxu0 %v136
    %377 = vmatprep.subr.bf16.mxu0 0
    %378 = vmatpush1.bf16.msra.mxu0 %v137
    %379 = vmatprep.subr.bf16.mxu0 0
    %380 = vmatpush1.bf16.msra.mxu0 %v138
    %381 = vmatprep.subr.bf16.mxu0 0
    %382 = vmatpush1.bf16.msra.mxu0 %v139
    %383 = vmatprep.subr.bf16.mxu0 0
    %384 = vmatpush1.bf16.msra.mxu0 %v140
    %385 = vmatprep.subr.bf16.mxu0 0
    %386 = vmatpush1.bf16.msra.mxu0 %v141
    %387 = vmatprep.subr.bf16.mxu0 0
    %388 = vmatpush1.bf16.msra.mxu0 %v142
    %389 = vmatprep.subr.bf16.mxu0 0
    %390 = vmatpush1.bf16.msra.mxu0 0
    %391 = vmatprep.subr.bf16.mxu0 0
    %392 = vmatpush1.bf16.msra.mxu0 0
    %393 = vmatprep.subr.bf16.mxu0 0
    %394 = vmatpush1.bf16.msra.mxu0 0
    %395 = vmatprep.subr.bf16.mxu0 0
    %396 = vmatpush1.bf16.msra.mxu0 0
    %397 = vmatprep.subr.bf16.mxu0 0
    %398 = vmatpush1.bf16.msra.mxu0 0
    %399 = vmatprep.subr.bf16.mxu0 0
    %400 = vmatpush1.bf16.msra.mxu0 0
    %401 = vmatprep.subr.bf16.mxu0 0
    %402 = vmatpush1.bf16.msra.mxu0 0
    %403 = vmatprep.subr.bf16.mxu0 0
    %404 = vmatpush1.bf16.msra.mxu0 0
    %405 = vmatprep.mubr.bf16.mxu0 0
    %406 = vmatmul.mubr.bf16.gmra.mrb[0].mxu0 %v372
    %v407 = vpop.f32.mrb[0].mxu0
    %v408 = vadd.f32 %v101, %v407
    %v409 = vpop.f32.mrb[0].mxu0
    %v410 = vpop.f32.mrb[0].mxu0
    %v411 = vpop.f32.mrb[0].mxu0
    %412 = vdwg.mxu0
    %v413 = vpack.c.bf16 %v408, %v408
    %v414 = vtanh.bf16.pop %v413
    %415 = vmatprep.subr.bf16.mxu0 0
    %416 = vmatpush1.bf16.msra.mxu0 %v231
    %417 = vmatprep.subr.bf16.mxu0 0
    %418 = vmatpush1.bf16.msra.mxu0 %v232
    %419 = vmatprep.subr.bf16.mxu0 0
    %420 = vmatpush1.bf16.msra.mxu0 %v233
    %421 = vmatprep.subr.bf16.mxu0 0
    %422 = vmatpush1.bf16.msra.mxu0 %v234
    %423 = vmatprep.subr.bf16.mxu0 0
    %424 = vmatpush1.bf16.msra.mxu0 %v235
    %425 = vmatprep.subr.bf16.mxu0 0
    %426 = vmatpush1.bf16.msra.mxu0 %v236
    %427 = vmatprep.subr.bf16.mxu0 0
    %428 = vmatpush1.bf16.msra.mxu0 %v237
    %429 = vmatprep.subr.bf16.mxu0 0
    %430 = vmatpush1.bf16.msra.mxu0 %v238
    %431 = vmatprep.subr.bf16.mxu0 0
    %432 = vmatpush1.bf16.msra.mxu0 0
    %433 = vmatprep.subr.bf16.mxu0 0
    %434 = vmatpush1.bf16.msra.mxu0 0
    %435 = vmatprep.subr.bf16.mxu0 0
    %436 = vmatpush1.bf16.msra.mxu0 0
    %437 = vmatprep.subr.bf16.mxu0 0
    %438 = vmatpush1.bf16.msra.mxu0 0
    %439 = vmatprep.subr.bf16.mxu0 0
    %440 = vmatpush1.bf16.msra.mxu0 0
    %441 = vmatprep.subr.bf16.mxu0 0
    %442 = vmatpush1.bf16.msra.mxu0 0
    %443 = vmatprep.subr.bf16.mxu0 0
    %444 = vmatpush1.bf16.msra.mxu0 0
    %445 = vmatprep.subr.bf16.mxu0 0
    %446 = vmatpush1.bf16.msra.mxu0 0
    %447 = vmatprep.mubr.bf16.mxu0 0
    %448 = vmatmul.mubr.bf16.gmra.mrb[0].mxu0 %v414
    %v449 = vpop.f32.mrb[0].mxu0
    %v450 = vadd.f32 %v197, %v449
    %v451 = vpop.f32.mrb[0].mxu0
    %v452 = vpop.f32.mrb[0].mxu0
    %v453 = vpop.f32.mrb[0].mxu0
    %454 = vdwg.mxu0
    %v455 = vadd.f32 %v371, %v450
    %v456 = vpack.c.bf16 %v455, %v455
    %457 = vmatprep.subr.bf16.mxu0 0
    %458 = vmatpush1.bf16.msra.mxu0 %v135
    %459 = vmatprep.subr.bf16.mxu0 0
    %460 = vmatpush1.bf16.msra.mxu0 %v136
    %461 = vmatprep.subr.bf16.mxu0 0
    %462 = vmatpush1.bf16.msra.mxu0 %v137
    %463 = vmatprep.subr.bf16.mxu0 0
    %464 = vmatpush1.bf16.msra.mxu0 %v138
    %465 = vmatprep.subr.bf16.mxu0 0
    %466 = vmatpush1.bf16.msra.mxu0 %v139
    %467 = vmatprep.subr.bf16.mxu0 0
    %468 = vmatpush1.bf16.msra.mxu0 %v140
    %469 = vmatprep.subr.bf16.mxu0 0
    %470 = vmatpush1.bf16.msra.mxu0 %v141
    %471 = vmatprep.subr.bf16.mxu0 0
    %472 = vmatpush1.bf16.msra.mxu0 %v142
    %473 = vmatprep.subr.bf16.mxu0 0
    %474 = vmatpush1.bf16.msra.mxu0 0
    %475 = vmatprep.subr.bf16.mxu0 0
    %476 = vmatpush1.bf16.msra.mxu0 0
    %477 = vmatprep.subr.bf16.mxu0 0
    %478 = vmatpush1.bf16.msra.mxu0 0
    %479 = vmatprep.subr.bf16.mxu0 0
    %480 = vmatpush1.bf16.msra.mxu0 0
    %481 = vmatprep.subr.bf16.mxu0 0
    %482 = vmatpush1.bf16.msra.mxu0 0
    %483 = vmatprep.subr.bf16.mxu0 0
    %484 = vmatpush1.bf16.msra.mxu0 0
    %485 = vmatprep.subr.bf16.mxu0 0
    %486 = vmatpush1.bf16.msra.mxu0 0
    %487 = vmatprep.subr.bf16.mxu0 0
    %488 = vmatpush1.bf16.msra.mxu0 0
    %489 = vmatprep.mubr.bf16.mxu0 0
    %490 = vmatmul.mubr.bf16.gmra.mrb[0].mxu0 %v456
    %v491 = vpop.f32.mrb[0].mxu0
    %v492 = vadd.f32 %v101, %v491
    %v493 = vpop.f32.mrb[0].mxu0
    %v494 = vpop.f32.mrb[0].mxu0
    %v495 = vpop.f32.mrb[0].mxu0
    %496 = vdwg.mxu0
    %v497 = vpack.c.bf16 %v492, %v492
    %v498 = vtanh.bf16.pop %v497
    %499 = vmatprep.subr.bf16.mxu0 0
    %500 = vmatpush1.bf16.msra.mxu0 %v231
    %501 = vmatprep.subr.bf16.mxu0 0
    %502 = vmatpush1.bf16.msra.mxu0 %v232
    %503 = vmatprep.subr.bf16.mxu0 0
    %504 = vmatpush1.bf16.msra.mxu0 %v233
    %505 = vmatprep.subr.bf16.mxu0 0
    %506 = vmatpush1.bf16.msra.mxu0 %v234
    %507 = vmatprep.subr.bf16.mxu0 0
    %508 = vmatpush1.bf16.msra.mxu0 %v235
    %509 = vmatprep.subr.bf16.mxu0 0
    %510 = vmatpush1.bf16.msra.mxu0 %v236
    %511 = vmatprep.subr.bf16.mxu0 0
    %512 = vmatpush1.bf16.msra.mxu0 %v237
    %513 = vmatprep.subr.bf16.mxu0 0
    %514 = vmatpush1.bf16.msra.mxu0 %v238
    %515 = vmatprep.subr.bf16.mxu0 0
    %516 = vmatpush1.bf16.msra.mxu0 0
    %517 = vmatprep.subr.bf16.mxu0 0
    %518 = vmatpush1.bf16.msra.mxu0 0
    %519 = vmatprep.subr.bf16.mxu0 0
    %520 = vmatpush1.bf16.msra.mxu0 0
    %521 = vmatprep.subr.bf16.mxu0 0
    %522 = vmatpush1.bf16.msra.mxu0 0
    %523 = vmatprep.subr.bf16.mxu0 0
    %524 = vmatpush1.bf16.msra.mxu0 0
    %525 = vmatprep.subr.bf16.mxu0 0
    %526 = vmatpush1.bf16.msra.mxu0 0
    %527 = vmatprep.subr.bf16.mxu0 0
    %528 = vmatpush1.bf16.msra.mxu0 0
    %529 = vmatprep.subr.bf16.mxu0 0
    %530 = vmatpush1.bf16.msra.mxu0 0
    %531 = vmatprep.mubr.bf16.mxu0 0
    %532 = vmatmul.mubr.bf16.gmra.mrb[0].mxu0 %v498
    %v533 = vpop.f32.mrb[0].mxu0
    %v534 = vadd.f32 %v197, %v533
    %v535 = vpop.f32.mrb[0].mxu0
    %v536 = vpop.f32.mrb[0].mxu0
    %v537 = vpop.f32.mrb[0].mxu0
    %538 = vdwg.mxu0
    %v539 = vadd.f32 %v455, %v534
    %v540 = vpack.c.bf16 %v539, %v539
    %541 = vmatprep.subr.bf16.mxu0 0
    %542 = vmatpush1.bf16.msra.mxu0 %v135
    %543 = vmatprep.subr.bf16.mxu0 0
    %544 = vmatpush1.bf16.msra.mxu0 %v136
    %545 = vmatprep.subr.bf16.mxu0 0
    %546 = vmatpush1.bf16.msra.mxu0 %v137
    %547 = vmatprep.subr.bf16.mxu0 0
    %548 = vmatpush1.bf16.msra.mxu0 %v138
    %549 = vmatprep.subr.bf16.mxu0 0
    %550 = vmatpush1.bf16.msra.mxu0 %v139
    %551 = vmatprep.subr.bf16.mxu0 0
    %552 = vmatpush1.bf16.msra.mxu0 %v140
    %553 = vmatprep.subr.bf16.mxu0 0
    %554 = vmatpush1.bf16.msra.mxu0 %v141
    %555 = vmatprep.subr.bf16.mxu0 0
    %556 = vmatpush1.bf16.msra.mxu0 %v142
    %557 = vmatprep.subr.bf16.mxu0 0
    %558 = vmatpush1.bf16.msra.mxu0 0
    %559 = vmatprep.subr.bf16.mxu0 0
    %560 = vmatpush1.bf16.msra.mxu0 0
    %561 = vmatprep.subr.bf16.mxu0 0
    %562 = vmatpush1.bf16.msra.mxu0 0
    %563 = vmatprep.subr.bf16.mxu0 0
    %564 = vmatpush1.bf16.msra.mxu0 0
    %565 = vmatprep.subr.bf16.mxu0 0
    %566 = vmatpush1.bf16.msra.mxu0 0
    %567 = vmatprep.subr.bf16.mxu0 0
    %568 = vmatpush1.bf16.msra.mxu0 0
    %569 = vmatprep.subr.bf16.mxu0 0
    %570 = vmatpush1.bf16.msra.mxu0 0
    %571 = vmatprep.subr.bf16.mxu0 0
    %572 = vmatpush1.bf16.msra.mxu0 0
    %573 = vmatprep.mubr.bf16.mxu0 0
    %574 = vmatmul.mubr.bf16.gmra.mrb[0].mxu0 %v540
    %v575 = vpop.f32.mrb[0].mxu0
    %v576 = vadd.f32 %v101, %v575
    %v577 = vpop.f32.mrb[0].mxu0
    %v578 = vpop.f32.mrb[0].mxu0
    %v579 = vpop.f32.mrb[0].mxu0
    %580 = vdwg.mxu0
    %v581 = vpack.c.bf16 %v576, %v576
    %v582 = vtanh.bf16.pop %v581
    %583 = vmatprep.subr.bf16.mxu0 0
    %584 = vmatpush1.bf16.msra.mxu0 %v231
    %585 = vmatprep.subr.bf16.mxu0 0
    %586 = vmatpush1.bf16.msra.mxu0 %v232
    %587 = vmatprep.subr.bf16.mxu0 0
    %588 = vmatpush1.bf16.msra.mxu0 %v233
    %589 = vmatprep.subr.bf16.mxu0 0
    %590 = vmatpush1.bf16.msra.mxu0 %v234
    %591 = vmatprep.subr.bf16.mxu0 0
    %592 = vmatpush1.bf16.msra.mxu0 %v235
    %593 = vmatprep.subr.bf16.mxu0 0
    %594 = vmatpush1.bf16.msra.mxu0 %v236
    %595 = vmatprep.subr.bf16.mxu0 0
    %596 = vmatpush1.bf16.msra.mxu0 %v237
    %597 = vmatprep.subr.bf16.mxu0 0
    %598 = vmatpush1.bf16.msra.mxu0 %v238
    %599 = vmatprep.subr.bf16.mxu0 0
    %600 = vmatpush1.bf16.msra.mxu0 0
    %601 = vmatprep.subr.bf16.mxu0 0
    %602 = vmatpush1.bf16.msra.mxu0 0
    %603 = vmatprep.subr.bf16.mxu0 0
    %604 = vmatpush1.bf16.msra.mxu0 0
    %605 = vmatprep.subr.bf16.mxu0 0
    %606 = vmatpush1.bf16.msra.mxu0 0
    %607 = vmatprep.subr.bf16.mxu0 0
    %608 = vmatpush1.bf16.msra.mxu0 0
    %609 = vmatprep.subr.bf16.mxu0 0
    %610 = vmatpush1.bf16.msra.mxu0 0
    %611 = vmatprep.subr.bf16.mxu0 0
    %612 = vmatpush1.bf16.msra.mxu0 0
    %613 = vmatprep.subr.bf16.mxu0 0
    %614 = vmatpush1.bf16.msra.mxu0 0
    %615 = vmatprep.mubr.bf16.mxu0 0
    %616 = vmatmul.mubr.bf16.gmra.mrb[0].mxu0 %v582
    %v617 = vpop.f32.mrb[0].mxu0
    %v618 = vadd.f32 %v197, %v617
    %v619 = vpop.f32.mrb[0].mxu0
    %v620 = vpop.f32.mrb[0].mxu0
    %v621 = vpop.f32.mrb[0].mxu0
    %622 = vdwg.mxu0
    %v623 = vadd.f32 %v539, %v618
    %v624 = vpack.c.bf16 %v623, %v623
    %625 = vmatprep.subr.bf16.mxu0 0
    %626 = vmatpush1.bf16.msra.mxu0 %v135
    %627 = vmatprep.subr.bf16.mxu0 0
    %628 = vmatpush1.bf16.msra.mxu0 %v136
    %629 = vmatprep.subr.bf16.mxu0 0
    %630 = vmatpush1.bf16.msra.mxu0 %v137
    %631 = vmatprep.subr.bf16.mxu0 0
    %632 = vmatpush1.bf16.msra.mxu0 %v138
    %633 = vmatprep.subr.bf16.mxu0 0
    %634 = vmatpush1.bf16.msra.mxu0 %v139
    %635 = vmatprep.subr.bf16.mxu0 0
    %636 = vmatpush1.bf16.msra.mxu0 %v140
    %637 = vmatprep.subr.bf16.mxu0 0
    %638 = vmatpush1.bf16.msra.mxu0 %v141
    %639 = vmatprep.subr.bf16.mxu0 0
    %640 = vmatpush1.bf16.msra.mxu0 %v142
    %641 = vmatprep.subr.bf16.mxu0 0
    %642 = vmatpush1.bf16.msra.mxu0 0
    %643 = vmatprep.subr.bf16.mxu0 0
    %644 = vmatpush1.bf16.msra.mxu0 0
    %645 = vmatprep.subr.bf16.mxu0 0
    %646 = vmatpush1.bf16.msra.mxu0 0
    %647 = vmatprep.subr.bf16.mxu0 0
    %648 = vmatpush1.bf16.msra.mxu0 0
    %649 = vmatprep.subr.bf16.mxu0 0
    %650 = vmatpush1.bf16.msra.mxu0 0
    %651 = vmatprep.subr.bf16.mxu0 0
    %652 = vmatpush1.bf16.msra.mxu0 0
    %653 = vmatprep.subr.bf16.mxu0 0
    %654 = vmatpush1.bf16.msra.mxu0 0
    %655 = vmatprep.subr.bf16.mxu0 0
    %656 = vmatpush1.bf16.msra.mxu0 0
    %657 = vmatprep.mubr.bf16.mxu0 0
    %658 = vmatmul.mubr.bf16.gmra.mrb[0].mxu0 %v624
    %v659 = vpop.f32.mrb[0].mxu0
    %v660 = vadd.f32 %v101, %v659
    %v661 = vpop.f32.mrb[0].mxu0
    %v662 = vpop.f32.mrb[0].mxu0
    %v663 = vpop.f32.mrb[0].mxu0
    %664 = vdwg.mxu0
    %v665 = vpack.c.bf16 %v660, %v660
    %v666 = vtanh.bf16.pop %v665
    %667 = vmatprep.subr.bf16.mxu0 0
    %668 = vmatpush1.bf16.msra.mxu0 %v231
    %669 = vmatprep.subr.bf16.mxu0 0
    %670 = vmatpush1.bf16.msra.mxu0 %v232
    %671 = vmatprep.subr.bf16.mxu0 0
    %672 = vmatpush1.bf16.msra.mxu0 %v233
    %673 = vmatprep.subr.bf16.mxu0 0
    %674 = vmatpush1.bf16.msra.mxu0 %v234
    %675 = vmatprep.subr.bf16.mxu0 0
    %676 = vmatpush1.bf16.msra.mxu0 %v235
    %677 = vmatprep.subr.bf16.mxu0 0
    %678 = vmatpush1.bf16.msra.mxu0 %v236
    %679 = vmatprep.subr.bf16.mxu0 0
    %680 = vmatpush1.bf16.msra.mxu0 %v237
    %681 = vmatprep.subr.bf16.mxu0 0
    %682 = vmatpush1.bf16.msra.mxu0 %v238
    %683 = vmatprep.subr.bf16.mxu0 0
    %684 = vmatpush1.bf16.msra.mxu0 0
    %685 = vmatprep.subr.bf16.mxu0 0
    %686 = vmatpush1.bf16.msra.mxu0 0
    %687 = vmatprep.subr.bf16.mxu0 0
    %688 = vmatpush1.bf16.msra.mxu0 0
    %689 = vmatprep.subr.bf16.mxu0 0
    %690 = vmatpush1.bf16.msra.mxu0 0
    %691 = vmatprep.subr.bf16.mxu0 0
    %692 = vmatpush1.bf16.msra.mxu0 0
    %693 = vmatprep.subr.bf16.mxu0 0
    %694 = vmatpush1.bf16.msra.mxu0 0
    %695 = vmatprep.subr.bf16.mxu0 0
    %696 = vmatpush1.bf16.msra.mxu0 0
    %697 = vmatprep.subr.bf16.mxu0 0
    %698 = vmatpush1.bf16.msra.mxu0 0
    %699 = vmatprep.mubr.bf16.mxu0 0
    %700 = vmatmul.mubr.bf16.gmra.mrb[0].mxu0 %v666
    %v701 = vpop.f32.mrb[0].mxu0
    %v702 = vadd.f32 %v197, %v701
    %v703 = vpop.f32.mrb[0].mxu0
    %v704 = vpop.f32.mrb[0].mxu0
    %v705 = vpop.f32.mrb[0].mxu0
    %706 = vdwg.mxu0
    %v707 = vadd.f32 %v623, %v702
    %v708 = vpack.c.bf16 %v707, %v707
    %709 = vmatprep.subr.bf16.mxu0 0
    %710 = vmatpush1.bf16.msra.mxu0 %v135
    %711 = vmatprep.subr.bf16.mxu0 0
    %712 = vmatpush1.bf16.msra.mxu0 %v136
    %713 = vmatprep.subr.bf16.mxu0 0
    %714 = vmatpush1.bf16.msra.mxu0 %v137
    %715 = vmatprep.subr.bf16.mxu0 0
    %716 = vmatpush1.bf16.msra.mxu0 %v138
    %717 = vmatprep.subr.bf16.mxu0 0
    %718 = vmatpush1.bf16.msra.mxu0 %v139
    %719 = vmatprep.subr.bf16.mxu0 0
    %720 = vmatpush1.bf16.msra.mxu0 %v140
    %721 = vmatprep.subr.bf16.mxu0 0
    %722 = vmatpush1.bf16.msra.mxu0 %v141
    %723 = vmatprep.subr.bf16.mxu0 0
    %724 = vmatpush1.bf16.msra.mxu0 %v142
    %725 = vmatprep.subr.bf16.mxu0 0
    %726 = vmatpush1.bf16.msra.mxu0 0
    %727 = vmatprep.subr.bf16.mxu0 0
    %728 = vmatpush1.bf16.msra.mxu0 0
    %729 = vmatprep.subr.bf16.mxu0 0
    %730 = vmatpush1.bf16.msra.mxu0 0
    %731 = vmatprep.subr.bf16.mxu0 0
    %732 = vmatpush1.bf16.msra.mxu0 0
    %733 = vmatprep.subr.bf16.mxu0 0
    %734 = vmatpush1.bf16.msra.mxu0 0
    %735 = vmatprep.subr.bf16.mxu0 0
    %736 = vmatpush1.bf16.msra.mxu0 0
    %737 = vmatprep.subr.bf16.mxu0 0
    %738 = vmatpush1.bf16.msra.mxu0 0
    %739 = vmatprep.subr.bf16.mxu0 0
    %740 = vmatpush1.bf16.msra.mxu0 0
    %741 = vmatprep.mubr.bf16.mxu0 0
    %742 = vmatmul.mubr.bf16.gmra.mrb[0].mxu0 %v708
    %v743 = vpop.f32.mrb[0].mxu0
    %v744 = vadd.f32 %v101, %v743
    %v745 = vpop.f32.mrb[0].mxu0
    %v746 = vpop.f32.mrb[0].mxu0
    %v747 = vpop.f32.mrb[0].mxu0
    %748 = vdwg.mxu0
    %v749 = vpack.c.bf16 %v744, %v744
    %v750 = vtanh.bf16.pop %v749
    %751 = vmatprep.subr.bf16.mxu0 0
    %752 = vmatpush1.bf16.msra.mxu0 %v231
    %753 = vmatprep.subr.bf16.mxu0 0
    %754 = vmatpush1.bf16.msra.mxu0 %v232
    %755 = vmatprep.subr.bf16.mxu0 0
    %756 = vmatpush1.bf16.msra.mxu0 %v233
    %757 = vmatprep.subr.bf16.mxu0 0
    %758 = vmatpush1.bf16.msra.mxu0 %v234
    %759 = vmatprep.subr.bf16.mxu0 0
    %760 = vmatpush1.bf16.msra.mxu0 %v235
    %761 = vmatprep.subr.bf16.mxu0 0
    %762 = vmatpush1.bf16.msra.mxu0 %v236
    %763 = vmatprep.subr.bf16.mxu0 0
    %764 = vmatpush1.bf16.msra.mxu0 %v237
    %765 = vmatprep.subr.bf16.mxu0 0
    %766 = vmatpush1.bf16.msra.mxu0 %v238
    %767 = vmatprep.subr.bf16.mxu0 0
    %768 = vmatpush1.bf16.msra.mxu0 0
    %769 = vmatprep.subr.bf16.mxu0 0
    %770 = vmatpush1.bf16.msra.mxu0 0
    %771 = vmatprep.subr.bf16.mxu0 0
    %772 = vmatpush1.bf16.msra.mxu0 0
    %773 = vmatprep.subr.bf16.mxu0 0
    %774 = vmatpush1.bf16.msra.mxu0 0
    %775 = vmatprep.subr.bf16.mxu0 0
    %776 = vmatpush1.bf16.msra.mxu0 0
    %777 = vmatprep.subr.bf16.mxu0 0
    %778 = vmatpush1.bf16.msra.mxu0 0
    %779 = vmatprep.subr.bf16.mxu0 0
    %780 = vmatpush1.bf16.msra.mxu0 0
    %781 = vmatprep.subr.bf16.mxu0 0
    %782 = vmatpush1.bf16.msra.mxu0 0
    %783 = vmatprep.mubr.bf16.mxu0 0
    %784 = vmatmul.mubr.bf16.gmra.mrb[0].mxu0 %v750
    %v785 = vpop.f32.mrb[0].mxu0
    %v786 = vadd.f32 %v197, %v785
    %v787 = vpop.f32.mrb[0].mxu0
    %v788 = vpop.f32.mrb[0].mxu0
    %v789 = vpop.f32.mrb[0].mxu0
    %790 = vdwg.mxu0
    %v791 = vadd.f32 %v707, %v786
    %v792 = vpack.c.bf16 %v791, %v791
    %793 = vmatprep.subr.bf16.mxu0 0
    %794 = vmatpush1.bf16.msra.mxu0 %v135
    %795 = vmatprep.subr.bf16.mxu0 0
    %796 = vmatpush1.bf16.msra.mxu0 %v136
    %797 = vmatprep.subr.bf16.mxu0 0
    %798 = vmatpush1.bf16.msra.mxu0 %v137
    %799 = vmatprep.subr.bf16.mxu0 0
    %800 = vmatpush1.bf16.msra.mxu0 %v138
    %801 = vmatprep.subr.bf16.mxu0 0
    %802 = vmatpush1.bf16.msra.mxu0 %v139
    %803 = vmatprep.subr.bf16.mxu0 0
    %804 = vmatpush1.bf16.msra.mxu0 %v140
    %805 = vmatprep.subr.bf16.mxu0 0
    %806 = vmatpush1.bf16.msra.mxu0 %v141
    %807 = vmatprep.subr.bf16.mxu0 0
    %808 = vmatpush1.bf16.msra.mxu0 %v142
    %809 = vmatprep.subr.bf16.mxu0 0
    %810 = vmatpush1.bf16.msra.mxu0 0
    %811 = vmatprep.subr.bf16.mxu0 0
    %812 = vmatpush1.bf16.msra.mxu0 0
    %813 = vmatprep.subr.bf16.mxu0 0
    %814 = vmatpush1.bf16.msra.mxu0 0
    %815 = vmatprep.subr.bf16.mxu0 0
    %816 = vmatpush1.bf16.msra.mxu0 0
    %817 = vmatprep.subr.bf16.mxu0 0
    %818 = vmatpush1.bf16.msra.mxu0 0
    %819 = vmatprep.subr.bf16.mxu0 0
    %820 = vmatpush1.bf16.msra.mxu0 0
    %821 = vmatprep.subr.bf16.mxu0 0
    %822 = vmatpush1.bf16.msra.mxu0 0
    %823 = vmatprep.subr.bf16.mxu0 0
    %824 = vmatpush1.bf16.msra.mxu0 0
    %825 = vmatprep.mubr.bf16.mxu0 0
    %826 = vmatmul.mubr.bf16.gmra.mrb[0].mxu0 %v792
    %v827 = vpop.f32.mrb[0].mxu0
    %v828 = vadd.f32 %v101, %v827
    %v829 = vpop.f32.mrb[0].mxu0
    %v830 = vpop.f32.mrb[0].mxu0
    %v831 = vpop.f32.mrb[0].mxu0
    %832 = vdwg.mxu0
    %v833 = vpack.c.bf16 %v828, %v828
    %v834 = vtanh.bf16.pop %v833
    %835 = vmatprep.subr.bf16.mxu0 0
    %836 = vmatpush1.bf16.msra.mxu0 %v231
    %837 = vmatprep.subr.bf16.mxu0 0
    %838 = vmatpush1.bf16.msra.mxu0 %v232
    %839 = vmatprep.subr.bf16.mxu0 0
    %840 = vmatpush1.bf16.msra.mxu0 %v233
    %841 = vmatprep.subr.bf16.mxu0 0
    %842 = vmatpush1.bf16.msra.mxu0 %v234
    %843 = vmatprep.subr.bf16.mxu0 0
    %844 = vmatpush1.bf16.msra.mxu0 %v235
    %845 = vmatprep.subr.bf16.mxu0 0
    %846 = vmatpush1.bf16.msra.mxu0 %v236
    %847 = vmatprep.subr.bf16.mxu0 0
    %848 = vmatpush1.bf16.msra.mxu0 %v237
    %849 = vmatprep.subr.bf16.mxu0 0
    %850 = vmatpush1.bf16.msra.mxu0 %v238
    %851 = vmatprep.subr.bf16.mxu0 0
    %852 = vmatpush1.bf16.msra.mxu0 0
    %853 = vmatprep.subr.bf16.mxu0 0
    %854 = vmatpush1.bf16.msra.mxu0 0
    %855 = vmatprep.subr.bf16.mxu0 0
    %856 = vmatpush1.bf16.msra.mxu0 0
    %857 = vmatprep.subr.bf16.mxu0 0
    %858 = vmatpush1.bf16.msra.mxu0 0
    %859 = vmatprep.subr.bf16.mxu0 0
    %860 = vmatpush1.bf16.msra.mxu0 0
    %861 = vmatprep.subr.bf16.mxu0 0
    %862 = vmatpush1.bf16.msra.mxu0 0
    %863 = vmatprep.subr.bf16.mxu0 0
    %864 = vmatpush1.bf16.msra.mxu0 0
    %865 = vmatprep.subr.bf16.mxu0 0
    %866 = vmatpush1.bf16.msra.mxu0 0
    %867 = vmatprep.mubr.bf16.mxu0 0
    %868 = vmatmul.mubr.bf16.gmra.mrb[0].mxu0 %v834
    %v869 = vpop.f32.mrb[0].mxu0
    %v870 = vadd.f32 %v197, %v869
    %v871 = vpop.f32.mrb[0].mxu0
    %v872 = vpop.f32.mrb[0].mxu0
    %v873 = vpop.f32.mrb[0].mxu0
    %874 = vdwg.mxu0
    %v875 = vadd.f32 %v791, %v870
    %876 = vst [vmem:[#allocation8] sm:$0xff] %v875
    // Predicated region
    $region34: #{tpu_custom_call.1} parent=1 // pred_check
      _
    $region35: #{tpu_custom_call.1} parent=1 // pred_check_branch
      %878 = sbr.rel (0) target = $region37
    $region36: #{tpu_custom_call.1} parent=1 // pred_region
      %s880 = ssub.s32 128, 128
      %881 = vsyncadd [#allocation4], %s880
      %s883 = sshll.u32 [#allocation8], 4
      %s884 = int_to_ptr.vmem [resolvable:$true] %s883
      %886 = dma.vmem_to_hbm [thread:$0]  %s884, 128, %s5, [#allocation4]
    $region37: #{tpu_custom_call.1} parent=1 // pred_fallthru
      _
    // Predicated region
    $region38: #{tpu_custom_call.1} parent=1 // pred_check
      _
    $region39: #{tpu_custom_call.1} parent=1 // pred_check_branch
      %888 = sbr.rel (0) target = $region41
    $region40: #{tpu_custom_call.1} parent=1 // pred_region
      %889 = dma.done [#allocation4], 128
    $region41: #{tpu_custom_call.1} parent=1 // pred_fallthru
      _
    %890 = vsyncpa [#allocation3], 1
    %891 = vsyncpa [#allocation6], 1
    %892 = vsyncpa [#allocation4], 1

</llo_original>
